<compile_context>
chip_gen: v5e
topology: v5e:2x2
jax: 0.10.0
libtpu: 0.0.40
codegen_flags: <defaults>
</compile_context>

<pallas_src>
import functools

import jax
import jax.numpy as jnp
from jax.experimental import pallas as pl
from jax.experimental.pallas import tpu as pltpu


def _spatial_embed_kernel(x_ref, w_ref, b_ref, o_ref, acc_ref, *, inv_hw):
    # x_ref:   (Nb, C, HWb)  NCHW activation slab (spatial dim flattened on lanes)
    # w_ref:   (C, F)        1x1 conv weight, squeezed + transposed
    # b_ref:   (1, F)        bias
    # o_ref:   (Nb, F)       output rows for this batch tile
    # acc_ref: (Nb, C) f32   running spatial sum, persists across the HW grid axis
    k = pl.program_id(1)

    @pl.when(k == 0)
    def _():
        acc_ref[...] = jnp.zeros_like(acc_ref)

    # Spatial partial sum over the lane axis, accumulated in f32 (works for bf16 inputs too).
    acc_ref[...] += jnp.sum(x_ref[...].astype(jnp.float32), axis=-1)

    @pl.when(k == pl.num_programs(1) - 1)
    def _():
        # Mean-before-matmul: exact for a 1x1 conv (linear in x).
        mean = acc_ref[...] * inv_hw                                        # (Nb, C)
        y = jnp.dot(mean, w_ref[...], preferred_element_type=jnp.float32)   # (Nb, F)
        o_ref[...] = (y + b_ref[...]).astype(o_ref.dtype)


def _pick_batch_tile(n):
    # Output block (Nb, F): Nb must be a multiple of 8 or equal to N.
    for cand in (64, 32, 16, 8):
        if n % cand == 0:
            return cand
    return n  # small batches: one block covering the full batch dim


def _pick_hw_tile(hw, nb, c, itemsize, budget_bytes=8 << 20):
    # Keep the (double-buffered) x tile comfortably inside scoped VMEM on every gen (incl. v7x).
    if nb * c * hw * itemsize <= budget_bytes or hw % 128 != 0:
        return hw  # full spatial extent in one tile (also handles HW not multiple of 128)
    t = max(128, (budget_bytes // (nb * c * itemsize)) // 128 * 128)
    while hw % t != 0:  # need clean blocking so padded garbage never enters the sum
        t -= 128
    return t


def spatial_learned_embeddings(x_nchw, weight, bias):
    """x_nchw: (N, C=128, H, W); weight: (F, C, 1, 1); bias: (F,) -> (N, F)."""
    N, C, H, W = x_nchw.shape
    F = weight.shape[0]
    HW = H * W

    # Glue (all cheap / metadata-only): NCHW -> (N, C, HW); (F, C, 1, 1) -> (C, F); bias -> (1, F).
    x = x_nchw.reshape(N, C, HW)
    w = jnp.transpose(weight.reshape(F, C), (1, 0))
    b = bias.reshape(1, F)

    Nb = _pick_batch_tile(N)
    HWb = _pick_hw_tile(HW, Nb, C, x.dtype.itemsize)

    kernel = functools.partial(_spatial_embed_kernel, inv_hw=1.0 / HW)

    out = pl.pallas_call(
        kernel,
        out_shape=jax.ShapeDtypeStruct((N, F), x.dtype),
        grid_spec=pltpu.PrefetchScalarGridSpec(
            num_scalar_prefetch=0,
            grid=(N // Nb, HW // HWb),
            in_specs=[
                pl.BlockSpec((Nb, C, HWb), lambda i, k: (i, 0, k)),
                pl.BlockSpec((C, F), lambda i, k: (0, 0)),
                pl.BlockSpec((1, F), lambda i, k: (0, 0)),
            ],
            out_specs=pl.BlockSpec((Nb, F), lambda i, k: (i, 0)),
            scratch_shapes=[pltpu.VMEM((Nb, C), jnp.float32)],
        ),
        compiler_params=pltpu.CompilerParams(
            dimension_semantics=("parallel", "arbitrary")),
    )(x, w, b)
    return out


if __name__ == "__main__":
    # Module constants: in_channels fixed at 128 by nn.Conv2d(128, num_features, 1).
    N, C, H, W = 2, 128, 16, 16
    num_features = 32

    key = jax.random.PRNGKey(0)
    kx, kw, kb = jax.random.split(key, 3)

    x = jax.random.normal(kx, (N, C, H, W), dtype=jnp.float32)
    # Deterministic synthetic parameters (shapes from nn.Conv2d(128, num_features, 1)).
    weight = jax.random.normal(kw, (num_features, C, 1, 1), dtype=jnp.float32) * 0.05
    bias = jax.random.normal(kb, (num_features,), dtype=jnp.float32) * 0.05

    out = jax.block_until_ready(spatial_learned_embeddings(x, weight, bias))

    # Reference check in plain JAX (eval-mode dropout == identity).
    ref = jnp.einsum("nchw,fc->nf", x, weight.reshape(num_features, C)) / (H * W) + bias
    assert out.shape == (N, num_features)
    assert jnp.allclose(out, ref, atol=1e-4, rtol=1e-4)

    print("KERNEL_OK")
</pallas_src>

<mosaic_0001>
module attributes {stable_mosaic.version = 11 : i64} {
  func.func @_spatial_embed_kernel(%arg0: i32, %arg1: i32, %arg2: memref<2x128x256xf32, #tpu.memory_space<vmem>>, %arg3: memref<128x32xf32, #tpu.memory_space<vmem>>, %arg4: memref<1x32xf32, #tpu.memory_space<vmem>>, %arg5: memref<2x32xf32, #tpu.memory_space<vmem>>, %arg6: memref<2x128xf32, #tpu.memory_space<vmem>>) attributes {dimension_semantics = [#tpu.dimension_semantics<parallel>, #tpu.dimension_semantics<arbitrary>], iteration_bounds = array<i64: 1, 1>, scalar_prefetch = 0 : i64, scratch_operands = 1 : i64, tpu.core_type = #tpu.core_type<tc>, window_params = [{transform_indices = @transform_0, window_bounds = array<i64: 2, 128, 256>}, {pipeline_mode = #tpu.pipeline_mode<synchronous>, transform_indices = @transform_1, window_bounds = array<i64: 128, 32>}, {pipeline_mode = #tpu.pipeline_mode<synchronous>, transform_indices = @transform_2, window_bounds = array<i64: 1, 32>}, {transform_indices = @transform_3, window_bounds = array<i64: 2, 32>}]} {
    %c0_i32 = arith.constant 0 : i32
    %0 = arith.cmpi eq, %arg1, %c0_i32 : i32
    %1 = arith.extui %0 : i1 to i32
    %c0_i32_0 = arith.constant 0 : i32
    %2 = arith.cmpi ne, %1, %c0_i32_0 : i32
    scf.if %2 {
      %cst_9 = arith.constant 0.000000e+00 : f32
      %11 = vector.broadcast %cst_9 : f32 to vector<2x128xf32>
      %c0_10 = arith.constant 0 : index
      %c0_11 = arith.constant 0 : index
      %12 = vector.load %arg6[%c0_10, %c0_11] : memref<2x128xf32, #tpu.memory_space<vmem>>, vector<2x128xf32>
      tpu.vector_store %arg6[%c0_10, %c0_11], %11 {strides = array<i32>} : memref<2x128xf32, #tpu.memory_space<vmem>>, vector<2x128xf32>,
    } else {
    }
    %c0 = arith.constant 0 : index
    %c0_1 = arith.constant 0 : index
    %3 = vector.load %arg6[%c0, %c0_1] : memref<2x128xf32, #tpu.memory_space<vmem>>, vector<2x128xf32>
    %c0_2 = arith.constant 0 : index
    %c0_3 = arith.constant 0 : index
    %c0_4 = arith.constant 0 : index
    %4 = vector.load %arg2[%c0_2, %c0_3, %c0_4] : memref<2x128x256xf32, #tpu.memory_space<vmem>>, vector<2x128x256xf32>
    %cst = arith.constant dense<0.000000e+00> : vector<2x128xf32>
    %5 = vector.multi_reduction <add>, %4, %cst [2] : vector<2x128x256xf32> to vector<2x128xf32>
    %6 = arith.addf %3, %5 : vector<2x128xf32>
    %c0_5 = arith.constant 0 : index
    %c0_6 = arith.constant 0 : index
    %7 = vector.load %arg6[%c0_5, %c0_6] : memref<2x128xf32, #tpu.memory_space<vmem>>, vector<2x128xf32>
    tpu.vector_store %arg6[%c0_5, %c0_6], %6 {strides = array<i32>} : memref<2x128xf32, #tpu.memory_space<vmem>>, vector<2x128xf32>,
    %c0_i32_7 = arith.constant 0 : i32
    %8 = arith.cmpi eq, %arg1, %c0_i32_7 : i32
    %9 = arith.extui %8 : i1 to i32
    %c0_i32_8 = arith.constant 0 : i32
    %10 = arith.cmpi ne, %9, %c0_i32_8 : i32
    scf.if %10 {
      %c0_9 = arith.constant 0 : index
      %c0_10 = arith.constant 0 : index
      %11 = vector.load %arg6[%c0_9, %c0_10] : memref<2x128xf32, #tpu.memory_space<vmem>>, vector<2x128xf32>
      %cst_11 = arith.constant 3.906250e-03 : f32
      %12 = vector.broadcast %cst_11 : f32 to vector<2x128xf32>
      %13 = arith.mulf %11, %12 : vector<2x128xf32>
      %c0_12 = arith.constant 0 : index
      %c0_13 = arith.constant 0 : index
      %14 = vector.load %arg3[%c0_12, %c0_13] : memref<128x32xf32, #tpu.memory_space<vmem>>, vector<128x32xf32>
      %cst_14 = arith.constant dense<0.000000e+00> : vector<2x32xf32>
      %15 = tpu.matmul %13, %14, %cst_14 {dimension_numbers = #tpu.dot_dimension_numbers<[1], [0], [0], [1], [0, 0, 1, 1], [], []>} : vector<2x128xf32>, vector<128x32xf32>, vector<2x32xf32> -> vector<2x32xf32>
      %c0_15 = arith.constant 0 : index
      %c0_16 = arith.constant 0 : index
      %16 = vector.load %arg4[%c0_15, %c0_16] : memref<1x32xf32, #tpu.memory_space<vmem>>, vector<1x32xf32>
      %17 = vector.broadcast %16 : vector<1x32xf32> to vector<2x32xf32>
      %18 = arith.addf %15, %17 : vector<2x32xf32>
      %c0_17 = arith.constant 0 : index
      %c0_18 = arith.constant 0 : index
      %19 = vector.load %arg5[%c0_17, %c0_18] : memref<2x32xf32, #tpu.memory_space<vmem>>, vector<2x32xf32>
      tpu.vector_store %arg5[%c0_17, %c0_18], %18 {strides = array<i32>} : memref<2x32xf32, #tpu.memory_space<vmem>>, vector<2x32xf32>,
    } else {
    }
    return
  }
  func.func @transform_0(%arg0: i32, %arg1: i32) -> (i32, i32, i32) {
    %c0_i32 = arith.constant 0 : i32
    %c0_i32_0 = arith.constant 0 : i32
    return %arg0, %c0_i32, %arg1 : i32, i32, i32
  }
  func.func @transform_1(%arg0: i32, %arg1: i32) -> (i32, i32) {
    %c0_i32 = arith.constant 0 : i32
    %c0_i32_0 = arith.constant 0 : i32
    %c0_i32_1 = arith.constant 0 : i32
    return %c0_i32, %c0_i32_0 : i32, i32
  }
  func.func @transform_2(%arg0: i32, %arg1: i32) -> (i32, i32) {
    %c0_i32 = arith.constant 0 : i32
    %c0_i32_0 = arith.constant 0 : i32
    %c0_i32_1 = arith.constant 0 : i32
    return %c0_i32, %c0_i32_0 : i32, i32
  }
  func.func @transform_3(%arg0: i32, %arg1: i32) -> (i32, i32) {
    %c0_i32 = arith.constant 0 : i32
    %c0_i32_0 = arith.constant 0 : i32
    return %arg0, %c0_i32 : i32, i32
  }
}

</mosaic_0001>

<llo_original>
// kernel: tpu_custom_call.1
$region0: #{tpu_custom_call.1}
  #allocation0 [shape = 'u32[]', space=smem, size = 0x4, offset = 0x4, fixed_abs, tag = 'smem constant byte address 0x4 - core index']
  #allocation1 [shape = 'u32[72,128]{1,0:T(1,128)}', space=vmem, size = 0x9000, scoped, tag = 'internal scratch']
  #allocation2 [shape = 'f32[2,128]{1,0:T(2,128)}', space=vmem, size = 0x400, scoped, tag = 'scratch operand']
  %s0 = inlined_call_operand.hbm [shape: f32[2,128,256], index: 0, kind: input, shape index: {}]
  %s1 = inlined_call_operand.vmem [shape: f32[128,32], index: 1, kind: input, shape index: {}]
  %s2 = inlined_call_operand.vmem [shape: f32[1,32], index: 2, kind: input, shape index: {}]
  %s3 = inlined_call_operand.hbm [shape: f32[2,32], index: 3, kind: output, shape index: {}]
  %s4 = sld [smem:[#allocation0]]
  $region34: #{tpu_custom_call.1} parent=0
    _
  %s6 = ssub.s32 1, %s4
  %s7 = scalar_select 0, %s6, %s4
  $region1: #{tpu_custom_call.1} parent=0
    #allocation3 [shape = 'u8[262144]{0}', space=vmem, size = 0x40000, scoped, tag = 'input window, operand 0, single buffered']
    #allocation4 [shape = 's32[1]{0}', space=sflag, size = 0x4, scoped, tag = 'scoped memory for tpu_custom_call.1']
    #allocation5 [shape = 's32[1]{0}', space=sflag, size = 0x4, scoped, tag = 'scoped memory for tpu_custom_call.1']
    #allocation6 [shape = 'u8[1024]{0}', space=vmem, size = 0x400, scoped, tag = 'output window, operand 0, single buffered']
    %8 = vsyncpa [#allocation4], 0
    %9 = vsyncpa [#allocation5], 0
    // Predicated region
    $region2: #{tpu_custom_call.1} parent=1 // pred_check
      _
    $region3: #{tpu_custom_call.1} parent=1 // pred_check_branch
      %11 = sbr.rel (0) target = $region5
    $region4: #{tpu_custom_call.1} parent=1 // pred_region
      %13 = vsyncadd [#allocation4], 0
      %s14 = sshll.u32 %s0, 4
      %s15 = int_to_ptr.hbm [resolvable:$true] %s14
      %s16 = sshll.u32 [#allocation3], 4
      %s17 = int_to_ptr.vmem [resolvable:$true] %s16
      %22 = dma.hbm_to_vmem [thread:$0]  %s15, 8192, %s17, [#allocation4], 256, 256, 16
    $region5: #{tpu_custom_call.1} parent=1 // pred_fallthru
      _
    // Predicated region
    $region6: #{tpu_custom_call.1} parent=1 // pred_check
      _
    $region7: #{tpu_custom_call.1} parent=1 // pred_check_branch
      %24 = sbr.rel (0) target = $region9
    $region8: #{tpu_custom_call.1} parent=1 // pred_region
      _
    $region9: #{tpu_custom_call.1} parent=1 // pred_fallthru
      _
    // Predicated region
    $region10: #{tpu_custom_call.1} parent=1 // pred_check
      _
    $region11: #{tpu_custom_call.1} parent=1 // pred_check_branch
      %26 = sbr.rel (0) target = $region13
    $region12: #{tpu_custom_call.1} parent=1 // pred_region
      _
    $region13: #{tpu_custom_call.1} parent=1 // pred_fallthru
      _
    // Predicated region
    $region14: #{tpu_custom_call.1} parent=1 // pred_check
      _
    $region15: #{tpu_custom_call.1} parent=1 // pred_check_branch
      %28 = sbr.rel (0) target = $region17
    $region16: #{tpu_custom_call.1} parent=1 // pred_region
      %30 = dma.done [#allocation4], 8192
    $region17: #{tpu_custom_call.1} parent=1 // pred_fallthru
      _
    %p31 = scmp.eq.s32.totalorder 0, 0
    // Predicated region
    $region18: #{tpu_custom_call.1} parent=1 // pred_check
      %p32 = pneg %p31
    $region19: #{tpu_custom_call.1} parent=1 // pred_check_branch
      %34 = sbr.rel (%p32) target = $region21
    $region20: #{tpu_custom_call.1} parent=1 // pred_region
      %35 = vst [vmem:[#allocation2] sm:$0x3] 0.0
    $region21: #{tpu_custom_call.1} parent=1 // pred_fallthru
      _
    %v36 = vld [vmem:[#allocation2] sm:$0x3]
    %v37 = vld [vmem:[#allocation3] sm:$0xff]
    %v38 = vld [vmem:[#allocation3 + $0x8] sm:$0xff]
    %v39 = vld [vmem:[#allocation3 + $0x10] sm:$0xff]
    %v40 = vld [vmem:[#allocation3 + $0x18] sm:$0xff]
    %v41 = vld [vmem:[#allocation3 + $0x20] sm:$0xff]
    %v42 = vld [vmem:[#allocation3 + $0x28] sm:$0xff]
    %v43 = vld [vmem:[#allocation3 + $0x30] sm:$0xff]
    %v44 = vld [vmem:[#allocation3 + $0x38] sm:$0xff]
    %v45 = vld [vmem:[#allocation3 + $0x40] sm:$0xff]
    %v46 = vld [vmem:[#allocation3 + $0x48] sm:$0xff]
    %v47 = vld [vmem:[#allocation3 + $0x50] sm:$0xff]
    %v48 = vld [vmem:[#allocation3 + $0x58] sm:$0xff]
    %v49 = vld [vmem:[#allocation3 + $0x60] sm:$0xff]
    %v50 = vld [vmem:[#allocation3 + $0x68] sm:$0xff]
    %v51 = vld [vmem:[#allocation3 + $0x70] sm:$0xff]
    %v52 = vld [vmem:[#allocation3 + $0x78] sm:$0xff]
    %v53 = vld [vmem:[#allocation3 + $0x80] sm:$0xff]
    %v54 = vld [vmem:[#allocation3 + $0x88] sm:$0xff]
    %v55 = vld [vmem:[#allocation3 + $0x90] sm:$0xff]
    %v56 = vld [vmem:[#allocation3 + $0x98] sm:$0xff]
    %v57 = vld [vmem:[#allocation3 + $0xa0] sm:$0xff]
    %v58 = vld [vmem:[#allocation3 + $0xa8] sm:$0xff]
    %v59 = vld [vmem:[#allocation3 + $0xb0] sm:$0xff]
    %v60 = vld [vmem:[#allocation3 + $0xb8] sm:$0xff]
    %v61 = vld [vmem:[#allocation3 + $0xc0] sm:$0xff]
    %v62 = vld [vmem:[#allocation3 + $0xc8] sm:$0xff]
    %v63 = vld [vmem:[#allocation3 + $0xd0] sm:$0xff]
    %v64 = vld [vmem:[#allocation3 + $0xd8] sm:$0xff]
    %v65 = vld [vmem:[#allocation3 + $0xe0] sm:$0xff]
    %v66 = vld [vmem:[#allocation3 + $0xe8] sm:$0xff]
    %v67 = vld [vmem:[#allocation3 + $0xf0] sm:$0xff]
    %v68 = vld [vmem:[#allocation3 + $0xf8] sm:$0xff]
    %v69 = vld [vmem:[#allocation3 + $0x100] sm:$0xff]
    %v70 = vld [vmem:[#allocation3 + $0x108] sm:$0xff]
    %v71 = vld [vmem:[#allocation3 + $0x110] sm:$0xff]
    %v72 = vld [vmem:[#allocation3 + $0x118] sm:$0xff]
    %v73 = vld [vmem:[#allocation3 + $0x120] sm:$0xff]
    %v74 = vld [vmem:[#allocation3 + $0x128] sm:$0xff]
    %v75 = vld [vmem:[#allocation3 + $0x130] sm:$0xff]
    %v76 = vld [vmem:[#allocation3 + $0x138] sm:$0xff]
    %v77 = vld [vmem:[#allocation3 + $0x140] sm:$0xff]
    %v78 = vld [vmem:[#allocation3 + $0x148] sm:$0xff]
    %v79 = vld [vmem:[#allocation3 + $0x150] sm:$0xff]
    %v80 = vld [vmem:[#allocation3 + $0x158] sm:$0xff]
    %v81 = vld [vmem:[#allocation3 + $0x160] sm:$0xff]
    %v82 = vld [vmem:[#allocation3 + $0x168] sm:$0xff]
    %v83 = vld [vmem:[#allocation3 + $0x170] sm:$0xff]
    %v84 = vld [vmem:[#allocation3 + $0x178] sm:$0xff]
    %v85 = vld [vmem:[#allocation3 + $0x180] sm:$0xff]
    %v86 = vld [vmem:[#allocation3 + $0x188] sm:$0xff]
    %v87 = vld [vmem:[#allocation3 + $0x190] sm:$0xff]
    %v88 = vld [vmem:[#allocation3 + $0x198] sm:$0xff]
    %v89 = vld [vmem:[#allocation3 + $0x1a0] sm:$0xff]
    %v90 = vld [vmem:[#allocation3 + $0x1a8] sm:$0xff]
    %v91 = vld [vmem:[#allocation3 + $0x1b0] sm:$0xff]
    %v92 = vld [vmem:[#allocation3 + $0x1b8] sm:$0xff]
    %v93 = vld [vmem:[#allocation3 + $0x1c0] sm:$0xff]
    %v94 = vld [vmem:[#allocation3 + $0x1c8] sm:$0xff]
    %v95 = vld [vmem:[#allocation3 + $0x1d0] sm:$0xff]
    %v96 = vld [vmem:[#allocation3 + $0x1d8] sm:$0xff]
    %v97 = vld [vmem:[#allocation3 + $0x1e0] sm:$0xff]
    %v98 = vld [vmem:[#allocation3 + $0x1e8] sm:$0xff]
    %v99 = vld [vmem:[#allocation3 + $0x1f0] sm:$0xff]
    %v100 = vld [vmem:[#allocation3 + $0x1f8] sm:$0xff]
    %v101 = vadd.f32 %v37, %v38
    %102 = vadd.xlane.f32.xlu0 %v101
    %v103 = vpop.xlane.xlu0 %102
    %v104 = vadd.f32 %v39, %v40
    %105 = vadd.xlane.f32.xlu0 %v104
    %v106 = vpop.xlane.xlu0 %105
    %v107 = vadd.f32 %v41, %v42
    %108 = vadd.xlane.f32.xlu0 %v107
    %v109 = vpop.xlane.xlu0 %108
    %v110 = vadd.f32 %v43, %v44
    %111 = vadd.xlane.f32.xlu0 %v110
    %v112 = vpop.xlane.xlu0 %111
    %v113 = vadd.f32 %v45, %v46
    %114 = vadd.xlane.f32.xlu0 %v113
    %v115 = vpop.xlane.xlu0 %114
    %v116 = vadd.f32 %v47, %v48
    %117 = vadd.xlane.f32.xlu0 %v116
    %v118 = vpop.xlane.xlu0 %117
    %v119 = vadd.f32 %v49, %v50
    %120 = vadd.xlane.f32.xlu0 %v119
    %v121 = vpop.xlane.xlu0 %120
    %v122 = vadd.f32 %v51, %v52
    %123 = vadd.xlane.f32.xlu0 %v122
    %v124 = vpop.xlane.xlu0 %123
    %v125 = vadd.f32 %v53, %v54
    %126 = vadd.xlane.f32.xlu0 %v125
    %v127 = vpop.xlane.xlu0 %126
    %v128 = vadd.f32 %v55, %v56
    %129 = vadd.xlane.f32.xlu0 %v128
    %v130 = vpop.xlane.xlu0 %129
    %v131 = vadd.f32 %v57, %v58
    %132 = vadd.xlane.f32.xlu0 %v131
    %v133 = vpop.xlane.xlu0 %132
    %v134 = vadd.f32 %v59, %v60
    %135 = vadd.xlane.f32.xlu0 %v134
    %v136 = vpop.xlane.xlu0 %135
    %v137 = vadd.f32 %v61, %v62
    %138 = vadd.xlane.f32.xlu0 %v137
    %v139 = vpop.xlane.xlu0 %138
    %v140 = vadd.f32 %v63, %v64
    %141 = vadd.xlane.f32.xlu0 %v140
    %v142 = vpop.xlane.xlu0 %141
    %v143 = vadd.f32 %v65, %v66
    %144 = vadd.xlane.f32.xlu0 %v143
    %v145 = vpop.xlane.xlu0 %144
    %v146 = vadd.f32 %v67, %v68
    %147 = vadd.xlane.f32.xlu0 %v146
    %v148 = vpop.xlane.xlu0 %147
    %v149 = vadd.f32 %v69, %v70
    %150 = vadd.xlane.f32.xlu0 %v149
    %v151 = vpop.xlane.xlu0 %150
    %v152 = vadd.f32 %v71, %v72
    %153 = vadd.xlane.f32.xlu0 %v152
    %v154 = vpop.xlane.xlu0 %153
    %v155 = vadd.f32 %v73, %v74
    %156 = vadd.xlane.f32.xlu0 %v155
    %v157 = vpop.xlane.xlu0 %156
    %v158 = vadd.f32 %v75, %v76
    %159 = vadd.xlane.f32.xlu0 %v158
    %v160 = vpop.xlane.xlu0 %159
    %v161 = vadd.f32 %v77, %v78
    %162 = vadd.xlane.f32.xlu0 %v161
    %v163 = vpop.xlane.xlu0 %162
    %v164 = vadd.f32 %v79, %v80
    %165 = vadd.xlane.f32.xlu0 %v164
    %v166 = vpop.xlane.xlu0 %165
    %v167 = vadd.f32 %v81, %v82
    %168 = vadd.xlane.f32.xlu0 %v167
    %v169 = vpop.xlane.xlu0 %168
    %v170 = vadd.f32 %v83, %v84
    %171 = vadd.xlane.f32.xlu0 %v170
    %v172 = vpop.xlane.xlu0 %171
    %v173 = vadd.f32 %v85, %v86
    %174 = vadd.xlane.f32.xlu0 %v173
    %v175 = vpop.xlane.xlu0 %174
    %v176 = vadd.f32 %v87, %v88
    %177 = vadd.xlane.f32.xlu0 %v176
    %v178 = vpop.xlane.xlu0 %177
    %v179 = vadd.f32 %v89, %v90
    %180 = vadd.xlane.f32.xlu0 %v179
    %v181 = vpop.xlane.xlu0 %180
    %v182 = vadd.f32 %v91, %v92
    %183 = vadd.xlane.f32.xlu0 %v182
    %v184 = vpop.xlane.xlu0 %183
    %v185 = vadd.f32 %v93, %v94
    %186 = vadd.xlane.f32.xlu0 %v185
    %v187 = vpop.xlane.xlu0 %186
    %v188 = vadd.f32 %v95, %v96
    %189 = vadd.xlane.f32.xlu0 %v188
    %v190 = vpop.xlane.xlu0 %189
    %v191 = vadd.f32 %v97, %v98
    %192 = vadd.xlane.f32.xlu0 %v191
    %v193 = vpop.xlane.xlu0 %192
    %v194 = vadd.f32 %v99, %v100
    %195 = vadd.xlane.f32.xlu0 %v194
    %v196 = vpop.xlane.xlu0 %195
    %v229 = vlaneseq
    %v230 = vand.u32 %v229, 127
    %v231 = vperm.slane %v103, %v230
    %v232 = vadd.s32 %v230, 4294967288
    %v233 = vperm.slane %v106, %v232
    %vm234 = vcmask 130112
    %v235 = vsel %vm234, %v233, %v231
    %v236 = vadd.s32 %v230, 4294967280
    %v237 = vperm.slane %v109, %v236
    %vm238 = vcmask 195712
    %v239 = vsel %vm238, %v237, %v235
    %v240 = vadd.s32 %v230, 4294967272
    %v241 = vperm.slane %v112, %v240
    %vm242 = vcmask 261312
    %v243 = vsel %vm242, %v241, %v239
    %v244 = vadd.s32 %v230, 4294967264
    %v245 = vperm.slane %v115, %v244
    %vm246 = vcmask 326912
    %v247 = vsel %vm246, %v245, %v243
    %v248 = vadd.s32 %v230, 4294967256
    %v249 = vperm.slane %v118, %v248
    %vm250 = vcmask 392512
    %v251 = vsel %vm250, %v249, %v247
    %v252 = vadd.s32 %v230, 4294967248
    %v253 = vperm.slane %v121, %v252
    %vm254 = vcmask 458112
    %v255 = vsel %vm254, %v253, %v251
    %v256 = vadd.s32 %v230, 4294967240
    %v257 = vperm.slane %v124, %v256
    %vm258 = vcmask 523712
    %v259 = vsel %vm258, %v257, %v255
    %v260 = vadd.s32 %v230, 4294967232
    %v261 = vperm.slane %v127, %v260
    %vm262 = vcmask 589312
    %v263 = vsel %vm262, %v261, %v259
    %v264 = vadd.s32 %v230, 4294967224
    %v265 = vperm.slane %v130, %v264
    %vm266 = vcmask 654912
    %v267 = vsel %vm266, %v265, %v263
    %v268 = vadd.s32 %v230, 4294967216
    %v269 = vperm.slane %v133, %v268
    %vm270 = vcmask 720512
    %v271 = vsel %vm270, %v269, %v267
    %v272 = vadd.s32 %v230, 4294967208
    %v273 = vperm.slane %v136, %v272
    %vm274 = vcmask 786112
    %v275 = vsel %vm274, %v273, %v271
    %v276 = vadd.s32 %v230, 4294967200
    %v277 = vperm.slane %v139, %v276
    %vm278 = vcmask 851712
    %v279 = vsel %vm278, %v277, %v275
    %v280 = vadd.s32 %v230, 4294967192
    %v281 = vperm.slane %v142, %v280
    %vm282 = vcmask 917312
    %v283 = vsel %vm282, %v281, %v279
    %v284 = vadd.s32 %v230, 4294967184
    %v285 = vperm.slane %v145, %v284
    %vm286 = vcmask 982912
    %v287 = vsel %vm286, %v285, %v283
    %v288 = vadd.s32 %v230, 4294967176
    %v289 = vperm.slane %v148, %v288
    %vm290 = vcmask 1048512
    %v291 = vsel %vm290, %v289, %v287
    %v292 = vperm.slane %v151, %v230
    %v293 = vperm.slane %v154, %v232
    %v294 = vsel %vm234, %v293, %v292
    %v295 = vperm.slane %v157, %v236
    %v296 = vsel %vm238, %v295, %v294
    %v297 = vperm.slane %v160, %v240
    %v298 = vsel %vm242, %v297, %v296
    %v299 = vperm.slane %v163, %v244
    %v300 = vsel %vm246, %v299, %v298
    %v301 = vperm.slane %v166, %v248
    %v302 = vsel %vm250, %v301, %v300
    %v303 = vperm.slane %v169, %v252
    %v304 = vsel %vm254, %v303, %v302
    %v305 = vperm.slane %v172, %v256
    %v306 = vsel %vm258, %v305, %v304
    %v307 = vperm.slane %v175, %v260
    %v308 = vsel %vm262, %v307, %v306
    %v309 = vperm.slane %v178, %v264
    %v310 = vsel %vm266, %v309, %v308
    %v311 = vperm.slane %v181, %v268
    %v312 = vsel %vm270, %v311, %v310
    %v313 = vperm.slane %v184, %v272
    %v314 = vsel %vm274, %v313, %v312
    %v315 = vperm.slane %v187, %v276
    %v316 = vsel %vm278, %v315, %v314
    %v317 = vperm.slane %v190, %v280
    %v318 = vsel %vm282, %v317, %v316
    %v319 = vperm.slane %v193, %v284
    %v320 = vsel %vm286, %v319, %v318
    %v321 = vperm.slane %v196, %v288
    %v322 = vsel %vm290, %v321, %v320
    %vm323 = vcmask 1041409
    %v324 = vsel %vm323, %v322, %v291
    %v326 = vadd.f32 %v36, %v324
    %327 = vst [vmem:[#allocation2] sm:$0x3] %v326
    // Predicated region
    $region22: #{tpu_custom_call.1} parent=1 // pred_check
      %p328 = pneg %p31
    $region23: #{tpu_custom_call.1} parent=1 // pred_check_branch
      %330 = sbr.rel (%p328) target = $region25
    $region24: #{tpu_custom_call.1} parent=1 // pred_region
      %v331 = vld [vmem:[#allocation2] sm:$0x3]
      %v332 = vmul.f32 %v331, 0.00390625
      %v333 = vld [vmem:[%s1] sm:$0xff]
      %v334 = vld [vmem:[%s1 + $0x8] sm:$0xff]
      %v335 = vld [vmem:[%s1 + $0x10] sm:$0xff]
      %v336 = vld [vmem:[%s1 + $0x18] sm:$0xff]
      %v337 = vld [vmem:[%s1 + $0x20] sm:$0xff]
      %v338 = vld [vmem:[%s1 + $0x28] sm:$0xff]
      %v339 = vld [vmem:[%s1 + $0x30] sm:$0xff]
      %v340 = vld [vmem:[%s1 + $0x38] sm:$0xff]
      %v341 = vld [vmem:[%s1 + $0x40] sm:$0xff]
      %v342 = vld [vmem:[%s1 + $0x48] sm:$0xff]
      %v343 = vld [vmem:[%s1 + $0x50] sm:$0xff]
      %v344 = vld [vmem:[%s1 + $0x58] sm:$0xff]
      %v345 = vld [vmem:[%s1 + $0x60] sm:$0xff]
      %v346 = vld [vmem:[%s1 + $0x68] sm:$0xff]
      %v347 = vld [vmem:[%s1 + $0x70] sm:$0xff]
      %v348 = vld [vmem:[%s1 + $0x78] sm:$0xff]
      %v349 = vld [vmem:[%s2] sm:$0x1]
      %v351 = vperm.slane %v349, 0
      %353 = vmatpush.msra.mxu0 %v348
      %354 = vmatpush.msra.mxu0 %v347
      %355 = vmatpush.msra.mxu0 %v346
      %356 = vmatpush.msra.mxu0 %v345
      %357 = vmatpush.msra.mxu0 %v344
      %358 = vmatpush.msra.mxu0 %v343
      %359 = vmatpush.msra.mxu0 %v342
      %360 = vmatpush.msra.mxu0 %v341
      %361 = vmatpush.msra.mxu0 %v340
      %362 = vmatpush.msra.mxu0 %v339
      %363 = vmatpush.msra.mxu0 %v338
      %364 = vmatpush.msra.mxu0 %v337
      %365 = vmatpush.msra.mxu0 %v336
      %366 = vmatpush.msra.mxu0 %v335
      %367 = vmatpush.msra.mxu0 %v334
      %368 = vmatpush.msra.mxu0 %v333
      %369 = vmatmul.f32.gmra.mxu0 %v332
      %v370 = vpop.f32.mrf.mxu0
      %v371 = vadd.f32 %v351, %v370
      %372 = vdwg.mxu0
      %vm373 = vcmask 254976
      %374 = vst.msk [vmem:[#allocation6] sm:$0x3] %vm373, %v371
    $region25: #{tpu_custom_call.1} parent=1 // pred_fallthru
      _
    // Predicated region
    $region26: #{tpu_custom_call.1} parent=1 // pred_check
      _
    $region27: #{tpu_custom_call.1} parent=1 // pred_check_branch
      %376 = sbr.rel (0) target = $region29
    $region28: #{tpu_custom_call.1} parent=1 // pred_region
      %378 = vsyncadd [#allocation5], 0
      %s380 = sshll.u32 [#allocation6], 4
      %s381 = int_to_ptr.vmem [resolvable:$true] %s380
      %s382 = sshll.u32 %s3, 4
      %s383 = int_to_ptr.hbm [resolvable:$true] %s382
      %385 = dma.vmem_to_hbm [thread:$0]  %s381, 32, %s383, [#allocation5]
    $region29: #{tpu_custom_call.1} parent=1 // pred_fallthru
      _
    // Predicated region
    $region30: #{tpu_custom_call.1} parent=1 // pred_check
      _
    $region31: #{tpu_custom_call.1} parent=1 // pred_check_branch
      %387 = sbr.rel (0) target = $region33
    $region32: #{tpu_custom_call.1} parent=1 // pred_region
      %389 = dma.done [#allocation5], 32
    $region33: #{tpu_custom_call.1} parent=1 // pred_fallthru
      _
    %390 = vsyncpa [#allocation4], 1
    %391 = vsyncpa [#allocation5], 1

</llo_original>
